<compile_context>
chip_gen: v5e
topology: v5e:2x2
jax: 0.10.0
libtpu: 0.0.40
codegen_flags: <defaults>
</compile_context>

<pallas_src>
import functools

import jax
import jax.numpy as jnp
from jax.experimental import pallas as pl
from jax.experimental.pallas import tpu as pltpu


def _conv_relu_kernel(x_ref, w_ref, o_ref, col_ref, *,
                      KH, KW, W_pad, Cin, K, P_pad):
    """Fused circular-pad conv + bias + ReLU (flattened-spatial im2col).

    x_ref:   (N, Cin, HW_pad)   f32, NCHW flattened over (H, W_pad) + zero lane pad
    w_ref:   (Cout, K+1)        f32, k = (kh*KW + kw)*Cin + ci, column K = bias
    o_ref:   (N, Cout, P_pad)   f32, lane-dense flattened spatial output
    col_ref: (N, K+1, P_pad)    f32 VMEM scratch (packed im2col, spatial on lanes)
    """
    N = x_ref.shape[0]

    # ---- im2col: KH*KW static ref-sliced copies (no input materialization,
    # ---- no reshapes; full-lane stores of width P_pad) ----------------------
    for kh in range(KH):
        for kw in range(KW):
            tap = kh * KW + kw
            off = kh * W_pad + kw
            # NOTE: the K packing order (kh*KW + kw)*Cin + ci here must stay
            # consistent with the weight packing in the wrapper.
            col_ref[:, tap * Cin:(tap + 1) * Cin, :] = \
                x_ref[:, :, off:off + P_pad]

    # Bias row: ones, so bias rides along in the single packed matmul.
    col_ref[:, K:K + 1, :] = jnp.ones((N, 1, P_pad), dtype=col_ref.dtype)

    # ---- one packed 2D MXU matmul per batch element (N is tiny/static) ------
    w = w_ref[...]                                          # (Cout, K+1)
    for n in range(N):
        acc = jnp.dot(w, col_ref[n],
                      preferred_element_type=jnp.float32)   # (Cout, P_pad)
        o_ref[n] = jnp.maximum(acc, 0.0).astype(o_ref.dtype)  # pure-ReLU epilogue


def conv2d_circular_relu(x_nchw, weight_oihw, bias, stride):
    """Forward of _conv2d: circular pad (0, 2), conv(stride), bias, ReLU."""
    N, Cin, H, W = x_nchw.shape
    Cout, _, KH, KW = weight_oihw.shape
    PW = 2                                  # padding=(0, 2): H pad 0, W pad 2

    # TODO(synk): stride > 1 would turn the flattened-spatial tap slices into
    # strided lane slices (untested Mosaic path); only stride == 1 is exercised
    # by this module configuration.
    assert stride == 1, "only stride == 1 is supported by this kernel"

    # Input prep (cheap fused XLA on a ~10 KB tensor): circular W-pad in NCHW,
    # flatten (H, W_pad) onto the lane axis, zero-pad lanes so every tap slice
    # of width P_pad is in-bounds and lane-tile aligned in extent.
    x = x_nchw.astype(jnp.float32)
    xp = jnp.pad(x, ((0, 0), (0, 0), (0, 0), (PW, PW)), mode="wrap")
    W_pad = W + 2 * PW
    H_out = (H - KH) // stride + 1
    W_out = (W_pad - KW) // stride + 1

    P_pad = ((H_out * W_pad + 127) // 128) * 128            # lane-dense spatial
    max_off = (KH - 1) * W_pad + (KW - 1)
    HW_pad = max(P_pad + max_off, H * W_pad)

    x_flat = xp.reshape(N, Cin, H * W_pad)
    x_flat = jnp.pad(x_flat, ((0, 0), (0, 0), (0, HW_pad - H * W_pad)))

    # OIHW -> packed (Cout, K) with k = (kh*KW + kw)*Cin + ci, then append the
    # bias column -> (Cout, K+1).  Must match the col packing in the kernel.
    K = KH * KW * Cin
    w_flat = (jnp.transpose(weight_oihw, (0, 2, 3, 1))
              .reshape(Cout, K).astype(jnp.float32))
    w_aug = jnp.concatenate(
        [w_flat, bias.reshape(Cout, 1).astype(jnp.float32)], axis=1)

    kernel = functools.partial(_conv_relu_kernel, KH=KH, KW=KW, W_pad=W_pad,
                               Cin=Cin, K=K, P_pad=P_pad)

    cost = pl.CostEstimate(
        flops=2 * N * Cout * (K + 1) * P_pad,
        transcendentals=0,
        bytes_accessed=(x_flat.size + w_aug.size + N * Cout * P_pad) * 4,
    )

    out_flat = pl.pallas_call(
        kernel,
        out_shape=jax.ShapeDtypeStruct((N, Cout, P_pad), jnp.float32),
        in_specs=[
            pl.BlockSpec(memory_space=pltpu.MemorySpace.VMEM),   # x_flat
            pl.BlockSpec(memory_space=pltpu.MemorySpace.VMEM),   # packed w + bias
        ],
        out_specs=pl.BlockSpec(memory_space=pltpu.MemorySpace.VMEM),
        scratch_shapes=[pltpu.VMEM((N, K + 1, P_pad), jnp.float32)],  # im2col
        cost_estimate=cost,
    )(x_flat, w_aug)

    # Wrapper post-process (cheap): drop overflow/pad columns, split spatial.
    out = out_flat[:, :, :H_out * W_pad].reshape(N, Cout, H_out, W_pad)
    return out[:, :, :, :W_out]


def _reference(x_nchw, weight_oihw, bias, stride):
    # Pure-JAX reference: circular pad then VALID conv, bias, ReLU.
    x = jnp.pad(x_nchw, ((0, 0), (0, 0), (0, 0), (2, 2)), mode="wrap")
    y = jax.lax.conv_general_dilated(
        x, weight_oihw,
        window_strides=(stride, stride),
        padding="VALID",
        dimension_numbers=("NCHW", "OIHW", "NCHW"),
    )
    y = y + bias.reshape(1, -1, 1, 1)
    return jnp.maximum(y, 0.0)


if __name__ == "__main__":
    # Module config consistent with _conv2d(in_channel=4, out_channel=8,
    # kernel_size=3, stride=1)
    in_channel, out_channel, kernel_size, stride = 4, 8, 3, 1

    key = jax.random.PRNGKey(0)
    kx, kw, kb = jax.random.split(key, 3)

    # Input: NCHW, small shapes
    x = jax.random.normal(kx, (2, in_channel, 16, 16), dtype=jnp.float32)

    # Deterministic synthetic parameters (shapes as nn.Conv2d would create)
    weight = 0.1 * jax.random.normal(
        kw, (out_channel, in_channel, kernel_size, kernel_size), dtype=jnp.float32
    )
    bias = 0.1 * jax.random.normal(kb, (out_channel,), dtype=jnp.float32)

    out = conv2d_circular_relu(x, weight, bias, stride)
    out = jax.block_until_ready(out)

    ref = _reference(x, weight, bias, stride)
    assert out.shape == ref.shape, (out.shape, ref.shape)
    assert jnp.allclose(out, ref, atol=1e-4, rtol=1e-4), "mismatch vs reference conv"

    print("KERNEL_OK")
</pallas_src>

<mosaic_0001>
module attributes {stable_mosaic.version = 11 : i64} {
  func.func @_conv_relu_kernel(%arg0: memref<2x4x426xf32, #tpu.memory_space<vmem>>, %arg1: memref<8x37xf32, #tpu.memory_space<vmem>>, %arg2: memref<2x8x384xf32, #tpu.memory_space<vmem>>, %arg3: memref<2x37x384xf32, #tpu.memory_space<vmem>>) attributes {dimension_semantics = [], scalar_prefetch = 0 : i64, scratch_operands = 1 : i64, tpu.core_type = #tpu.core_type<tc>} {
    %c0 = arith.constant 0 : index
    %c0_0 = arith.constant 0 : index
    %c0_1 = arith.constant 0 : index
    %0 = vector.load %arg0[%c0, %c0_0, %c0_1] : memref<2x4x426xf32, #tpu.memory_space<vmem>>, vector<2x4x384xf32>
    %c0_2 = arith.constant 0 : index
    %c0_3 = arith.constant 0 : index
    %c0_4 = arith.constant 0 : index
    %1 = vector.load %arg3[%c0_2, %c0_3, %c0_4] : memref<2x37x384xf32, #tpu.memory_space<vmem>>, vector<2x4x384xf32>
    tpu.vector_store %arg3[%c0_2, %c0_3, %c0_4], %0 {strides = array<i32>} : memref<2x37x384xf32, #tpu.memory_space<vmem>>, vector<2x4x384xf32>,
    %c0_5 = arith.constant 0 : index
    %c0_6 = arith.constant 0 : index
    %c1 = arith.constant 1 : index
    %2 = vector.load %arg0[%c0_5, %c0_6, %c1] : memref<2x4x426xf32, #tpu.memory_space<vmem>>, vector<2x4x384xf32>
    %c0_7 = arith.constant 0 : index
    %c4 = arith.constant 4 : index
    %c0_8 = arith.constant 0 : index
    %3 = vector.load %arg3[%c0_7, %c4, %c0_8] : memref<2x37x384xf32, #tpu.memory_space<vmem>>, vector<2x4x384xf32>
    tpu.vector_store %arg3[%c0_7, %c4, %c0_8], %2 {strides = array<i32>} : memref<2x37x384xf32, #tpu.memory_space<vmem>>, vector<2x4x384xf32>,
    %c0_9 = arith.constant 0 : index
    %c0_10 = arith.constant 0 : index
    %c2 = arith.constant 2 : index
    %4 = vector.load %arg0[%c0_9, %c0_10, %c2] : memref<2x4x426xf32, #tpu.memory_space<vmem>>, vector<2x4x384xf32>
    %c0_11 = arith.constant 0 : index
    %c8 = arith.constant 8 : index
    %c0_12 = arith.constant 0 : index
    %5 = vector.load %arg3[%c0_11, %c8, %c0_12] : memref<2x37x384xf32, #tpu.memory_space<vmem>>, vector<2x4x384xf32>
    tpu.vector_store %arg3[%c0_11, %c8, %c0_12], %4 {strides = array<i32>} : memref<2x37x384xf32, #tpu.memory_space<vmem>>, vector<2x4x384xf32>,
    %c0_13 = arith.constant 0 : index
    %c0_14 = arith.constant 0 : index
    %c20 = arith.constant 20 : index
    %6 = vector.load %arg0[%c0_13, %c0_14, %c20] : memref<2x4x426xf32, #tpu.memory_space<vmem>>, vector<2x4x384xf32>
    %c0_15 = arith.constant 0 : index
    %c12 = arith.constant 12 : index
    %c0_16 = arith.constant 0 : index
    %7 = vector.load %arg3[%c0_15, %c12, %c0_16] : memref<2x37x384xf32, #tpu.memory_space<vmem>>, vector<2x4x384xf32>
    tpu.vector_store %arg3[%c0_15, %c12, %c0_16], %6 {strides = array<i32>} : memref<2x37x384xf32, #tpu.memory_space<vmem>>, vector<2x4x384xf32>,
    %c0_17 = arith.constant 0 : index
    %c0_18 = arith.constant 0 : index
    %c21 = arith.constant 21 : index
    %8 = vector.load %arg0[%c0_17, %c0_18, %c21] : memref<2x4x426xf32, #tpu.memory_space<vmem>>, vector<2x4x384xf32>
    %c0_19 = arith.constant 0 : index
    %c16 = arith.constant 16 : index
    %c0_20 = arith.constant 0 : index
    %9 = vector.load %arg3[%c0_19, %c16, %c0_20] : memref<2x37x384xf32, #tpu.memory_space<vmem>>, vector<2x4x384xf32>
    tpu.vector_store %arg3[%c0_19, %c16, %c0_20], %8 {strides = array<i32>} : memref<2x37x384xf32, #tpu.memory_space<vmem>>, vector<2x4x384xf32>,
    %c0_21 = arith.constant 0 : index
    %c0_22 = arith.constant 0 : index
    %c22 = arith.constant 22 : index
    %10 = vector.load %arg0[%c0_21, %c0_22, %c22] : memref<2x4x426xf32, #tpu.memory_space<vmem>>, vector<2x4x384xf32>
    %c0_23 = arith.constant 0 : index
    %c20_24 = arith.constant 20 : index
    %c0_25 = arith.constant 0 : index
    %11 = vector.load %arg3[%c0_23, %c20_24, %c0_25] : memref<2x37x384xf32, #tpu.memory_space<vmem>>, vector<2x4x384xf32>
    tpu.vector_store %arg3[%c0_23, %c20_24, %c0_25], %10 {strides = array<i32>} : memref<2x37x384xf32, #tpu.memory_space<vmem>>, vector<2x4x384xf32>,
    %c0_26 = arith.constant 0 : index
    %c0_27 = arith.constant 0 : index
    %c40 = arith.constant 40 : index
    %12 = vector.load %arg0[%c0_26, %c0_27, %c40] : memref<2x4x426xf32, #tpu.memory_space<vmem>>, vector<2x4x384xf32>
    %c0_28 = arith.constant 0 : index
    %c24 = arith.constant 24 : index
    %c0_29 = arith.constant 0 : index
    %13 = vector.load %arg3[%c0_28, %c24, %c0_29] : memref<2x37x384xf32, #tpu.memory_space<vmem>>, vector<2x4x384xf32>
    tpu.vector_store %arg3[%c0_28, %c24, %c0_29], %12 {strides = array<i32>} : memref<2x37x384xf32, #tpu.memory_space<vmem>>, vector<2x4x384xf32>,
    %c0_30 = arith.constant 0 : index
    %c0_31 = arith.constant 0 : index
    %c41 = arith.constant 41 : index
    %14 = vector.load %arg0[%c0_30, %c0_31, %c41] : memref<2x4x426xf32, #tpu.memory_space<vmem>>, vector<2x4x384xf32>
    %c0_32 = arith.constant 0 : index
    %c28 = arith.constant 28 : index
    %c0_33 = arith.constant 0 : index
    %15 = vector.load %arg3[%c0_32, %c28, %c0_33] : memref<2x37x384xf32, #tpu.memory_space<vmem>>, vector<2x4x384xf32>
    tpu.vector_store %arg3[%c0_32, %c28, %c0_33], %14 {strides = array<i32>} : memref<2x37x384xf32, #tpu.memory_space<vmem>>, vector<2x4x384xf32>,
    %c0_34 = arith.constant 0 : index
    %c0_35 = arith.constant 0 : index
    %c42 = arith.constant 42 : index
    %16 = vector.load %arg0[%c0_34, %c0_35, %c42] : memref<2x4x426xf32, #tpu.memory_space<vmem>>, vector<2x4x384xf32>
    %c0_36 = arith.constant 0 : index
    %c32 = arith.constant 32 : index
    %c0_37 = arith.constant 0 : index
    %17 = vector.load %arg3[%c0_36, %c32, %c0_37] : memref<2x37x384xf32, #tpu.memory_space<vmem>>, vector<2x4x384xf32>
    tpu.vector_store %arg3[%c0_36, %c32, %c0_37], %16 {strides = array<i32>} : memref<2x37x384xf32, #tpu.memory_space<vmem>>, vector<2x4x384xf32>,
    %cst = arith.constant 1.000000e+00 : f32
    %18 = vector.broadcast %cst : f32 to vector<2x1x384xf32>
    %c0_38 = arith.constant 0 : index
    %c36 = arith.constant 36 : index
    %c0_39 = arith.constant 0 : index
    %19 = vector.load %arg3[%c0_38, %c36, %c0_39] : memref<2x37x384xf32, #tpu.memory_space<vmem>>, vector<2x1x384xf32>
    tpu.vector_store %arg3[%c0_38, %c36, %c0_39], %18 {strides = array<i32>} : memref<2x37x384xf32, #tpu.memory_space<vmem>>, vector<2x1x384xf32>,
    %c0_40 = arith.constant 0 : index
    %c0_41 = arith.constant 0 : index
    %20 = vector.load %arg1[%c0_40, %c0_41] : memref<8x37xf32, #tpu.memory_space<vmem>>, vector<8x37xf32>
    %c0_42 = arith.constant 0 : index
    %c0_43 = arith.constant 0 : index
    %c0_44 = arith.constant 0 : index
    %21 = vector.load %arg3[%c0_42, %c0_43, %c0_44] : memref<2x37x384xf32, #tpu.memory_space<vmem>>, vector<1x37x384xf32>
    %22 = vector.shape_cast %21 : vector<1x37x384xf32> to vector<37x384xf32>
    %cst_45 = arith.constant dense<0.000000e+00> : vector<8x384xf32>
    %23 = tpu.matmul %20, %22, %cst_45 {dimension_numbers = #tpu.dot_dimension_numbers<[1], [0], [0], [1], [0, 0, 1, 1], [], []>} : vector<8x37xf32>, vector<37x384xf32>, vector<8x384xf32> -> vector<8x384xf32>
    %cst_46 = arith.constant 0.000000e+00 : f32
    %24 = vector.broadcast %cst_46 : f32 to vector<8x384xf32>
    %25 = arith.maximumf %23, %24 : vector<8x384xf32>
    %c0_47 = arith.constant 0 : index
    %c0_48 = arith.constant 0 : index
    %c0_49 = arith.constant 0 : index
    %26 = vector.load %arg2[%c0_47, %c0_48, %c0_49] : memref<2x8x384xf32, #tpu.memory_space<vmem>>, vector<1x8x384xf32>
    %27 = vector.shape_cast %26 : vector<1x8x384xf32> to vector<8x384xf32>
    %28 = vector.shape_cast %25 : vector<8x384xf32> to vector<1x8x384xf32>
    tpu.vector_store %arg2[%c0_47, %c0_48, %c0_49], %28 {strides = array<i32>} : memref<2x8x384xf32, #tpu.memory_space<vmem>>, vector<1x8x384xf32>,
    %c1_50 = arith.constant 1 : index
    %c0_51 = arith.constant 0 : index
    %c0_52 = arith.constant 0 : index
    %29 = vector.load %arg3[%c1_50, %c0_51, %c0_52] : memref<2x37x384xf32, #tpu.memory_space<vmem>>, vector<1x37x384xf32>
    %30 = vector.shape_cast %29 : vector<1x37x384xf32> to vector<37x384xf32>
    %cst_53 = arith.constant dense<0.000000e+00> : vector<8x384xf32>
    %31 = tpu.matmul %20, %30, %cst_53 {dimension_numbers = #tpu.dot_dimension_numbers<[1], [0], [0], [1], [0, 0, 1, 1], [], []>} : vector<8x37xf32>, vector<37x384xf32>, vector<8x384xf32> -> vector<8x384xf32>
    %cst_54 = arith.constant 0.000000e+00 : f32
    %32 = vector.broadcast %cst_54 : f32 to vector<8x384xf32>
    %33 = arith.maximumf %31, %32 : vector<8x384xf32>
    %c1_55 = arith.constant 1 : index
    %c0_56 = arith.constant 0 : index
    %c0_57 = arith.constant 0 : index
    %34 = vector.load %arg2[%c1_55, %c0_56, %c0_57] : memref<2x8x384xf32, #tpu.memory_space<vmem>>, vector<1x8x384xf32>
    %35 = vector.shape_cast %34 : vector<1x8x384xf32> to vector<8x384xf32>
    %36 = vector.shape_cast %33 : vector<8x384xf32> to vector<1x8x384xf32>
    tpu.vector_store %arg2[%c1_55, %c0_56, %c0_57], %36 {strides = array<i32>} : memref<2x8x384xf32, #tpu.memory_space<vmem>>, vector<1x8x384xf32>,
    return
  }
}

</mosaic_0001>

<llo_original>
// kernel: tpu_custom_call.1
$region0: #{tpu_custom_call.1}
  #allocation0 [shape = 'u32[]', space=smem, size = 0x4, offset = 0x4, fixed_abs, tag = 'smem constant byte address 0x4 - core index']
  #allocation1 [shape = 'u32[72,128]{1,0:T(1,128)}', space=vmem, size = 0x9000, scoped, tag = 'internal scratch']
  #allocation2 [shape = 'f32[2,37,384]{2,1,0:T(8,128)}', space=vmem, size = 0x1e000, scoped, tag = 'scratch operand']
  %s0 = inlined_call_operand.hbm [shape: f32[2,4,426], index: 0, kind: input, shape index: {}]
  %s1 = inlined_call_operand.hbm [shape: f32[8,37], index: 1, kind: input, shape index: {}]
  %s2 = inlined_call_operand.hbm [shape: f32[2,8,384], index: 2, kind: output, shape index: {}]
  %s3 = sld [smem:[#allocation0]]
  $region26: #{tpu_custom_call.1} parent=0
    _
  %s5 = ssub.s32 1, %s3
  %s6 = scalar_select 0, %s5, %s3
  $region1: #{tpu_custom_call.1} parent=0
    #allocation3 [shape = 'u8[16384]{0}', space=vmem, size = 0x4000, scoped, tag = 'input window, operand 0, single buffered']
    #allocation4 [shape = 's32[1]{0}', space=sflag, size = 0x4, scoped, tag = 'scoped memory for tpu_custom_call.1']
    #allocation5 [shape = 's32[1]{0}', space=sflag, size = 0x4, scoped, tag = 'scoped memory for tpu_custom_call.1']
    #allocation6 [shape = 'u8[4096]{0}', space=vmem, size = 0x1000, scoped, tag = 'input window, operand 1, single buffered']
    #allocation7 [shape = 's32[1]{0}', space=sflag, size = 0x4, scoped, tag = 'scoped memory for tpu_custom_call.1']
    #allocation8 [shape = 'u8[24576]{0}', space=vmem, size = 0x6000, scoped, tag = 'output window, operand 0, single buffered']
    %7 = vsyncpa [#allocation4], 0
    %8 = vsyncpa [#allocation7], 0
    %9 = vsyncpa [#allocation5], 0
    // Predicated region
    $region2: #{tpu_custom_call.1} parent=1 // pred_check
      _
    $region3: #{tpu_custom_call.1} parent=1 // pred_check_branch
      %11 = sbr.rel (0) target = $region5
    $region4: #{tpu_custom_call.1} parent=1 // pred_region
      %13 = vsyncadd [#allocation4], 0
      %s14 = sshll.u32 %s0, 4
      %s15 = int_to_ptr.hbm [resolvable:$true] %s14
      %s16 = sshll.u32 [#allocation3], 4
      %s17 = int_to_ptr.vmem [resolvable:$true] %s16
      %22 = dma.hbm_to_vmem [thread:$0]  %s15, 512, %s17, [#allocation4], 256, 256, 16
    $region5: #{tpu_custom_call.1} parent=1 // pred_fallthru
      _
    // Predicated region
    $region6: #{tpu_custom_call.1} parent=1 // pred_check
      _
    $region7: #{tpu_custom_call.1} parent=1 // pred_check_branch
      %24 = sbr.rel (0) target = $region9
    $region8: #{tpu_custom_call.1} parent=1 // pred_region
      %26 = vsyncadd [#allocation7], 0
      %s28 = sshll.u32 %s1, 4
      %s29 = int_to_ptr.hbm [resolvable:$true] %s28
      %s30 = sshll.u32 [#allocation6], 4
      %s31 = int_to_ptr.vmem [resolvable:$true] %s30
      %33 = dma.hbm_to_vmem [thread:$0]  %s29, 128, %s31, [#allocation7]
    $region9: #{tpu_custom_call.1} parent=1 // pred_fallthru
      _
    // Predicated region
    $region10: #{tpu_custom_call.1} parent=1 // pred_check
      _
    $region11: #{tpu_custom_call.1} parent=1 // pred_check_branch
      %35 = sbr.rel (0) target = $region13
    $region12: #{tpu_custom_call.1} parent=1 // pred_region
      %37 = dma.done [#allocation4], 512
    $region13: #{tpu_custom_call.1} parent=1 // pred_fallthru
      _
    // Predicated region
    $region14: #{tpu_custom_call.1} parent=1 // pred_check
      _
    $region15: #{tpu_custom_call.1} parent=1 // pred_check_branch
      %39 = sbr.rel (0) target = $region17
    $region16: #{tpu_custom_call.1} parent=1 // pred_region
      %41 = dma.done [#allocation7], 128
    $region17: #{tpu_custom_call.1} parent=1 // pred_fallthru
      _
    %v42 = vld [vmem:[#allocation3] sm:$0xff]
    %v43 = vld [vmem:[#allocation3 + $0x8] sm:$0xf]
    %v44 = vld [vmem:[#allocation3 + $0x10] sm:$0xff]
    %v45 = vld [vmem:[#allocation3 + $0x18] sm:$0xf]
    %50 = vst [vmem:[#allocation1] ss:$2 sm:$0xff] %v42
    %s51 = scalar_lea.vmem [#allocation1], 16
    %52 = vst [vmem:[%s51] ss:$2 sm:$0xff] %v43
    %v53 = vld.sshfl [vmem:[#allocation1] sm:$0xff pattern:$0x75316420]
    %v54 = vld.sshfl [vmem:[#allocation1 + $0x8] sm:$0xff pattern:$0x75316420]
    %v55 = vld.sshfl [vmem:[#allocation1 + $0x10] sm:$0xff pattern:$0x75316420]
    %s56 = scalar_lea.vmem [#allocation1], 32
    %57 = vst [vmem:[%s56] ss:$2 sm:$0xff] %v44
    %s58 = scalar_lea.vmem [#allocation1], 48
    %59 = vst [vmem:[%s58] ss:$2 sm:$0xff] %v45
    %v60 = vld.sshfl [vmem:[#allocation1 + $0x20] sm:$0xff pattern:$0x75316420]
    %v61 = vld.sshfl [vmem:[#allocation1 + $0x28] sm:$0xff pattern:$0x75316420]
    %v62 = vld.sshfl [vmem:[#allocation1 + $0x30] sm:$0xff pattern:$0x75316420]
    %69 = vst [vmem:[#allocation2] sm:$0xf] %v53
    %70 = vst [vmem:[#allocation2 + $0x8] sm:$0xf] %v54
    %71 = vst [vmem:[#allocation2 + $0x10] sm:$0xf] %v55
    %72 = vst [vmem:[#allocation2 + $0x78] sm:$0xf] %v60
    %73 = vst [vmem:[#allocation2 + $0x80] sm:$0xf] %v61
    %74 = vst [vmem:[#allocation2 + $0x88] sm:$0xf] %v62
    %v75 = vld [vmem:[#allocation3] sm:$0xff]
    %v76 = vld [vmem:[#allocation3 + $0x8] sm:$0xff]
    %v77 = vld [vmem:[#allocation3 + $0x10] sm:$0xff]
    %v78 = vld [vmem:[#allocation3 + $0x18] sm:$0xff]
    %s83 = scalar_lea.vmem [#allocation1], 1
    %84 = vst [vmem:[%s83] ss:$2 sm:$0xff] %v75
    %s85 = scalar_lea.vmem [#allocation1], 17
    %86 = vst [vmem:[%s85] ss:$2 sm:$0xff] %v76
    %v87 = vld.sshfl [vmem:[#allocation1] sm:$0xff pattern:$0x75316420]
    %v88 = vld.sshfl [vmem:[#allocation1 + $0x8] sm:$0xff pattern:$0x75316420]
    %v89 = vld.sshfl [vmem:[#allocation1 + $0x10] sm:$0xff pattern:$0x75316420]
    %v90 = vld.sshfl [vmem:[#allocation1 + $0x18] sm:$0xff pattern:$0x75316420]
    %s91 = scalar_lea.vmem [#allocation1], 33
    %92 = vst [vmem:[%s91] ss:$2 sm:$0xff] %v77
    %s93 = scalar_lea.vmem [#allocation1], 49
    %94 = vst [vmem:[%s93] ss:$2 sm:$0xff] %v78
    %v95 = vld.sshfl [vmem:[#allocation1 + $0x20] sm:$0xff pattern:$0x75316420]
    %v96 = vld.sshfl [vmem:[#allocation1 + $0x28] sm:$0xff pattern:$0x75316420]
    %v97 = vld.sshfl [vmem:[#allocation1 + $0x30] sm:$0xff pattern:$0x75316420]
    %v98 = vld.sshfl [vmem:[#allocation1 + $0x38] sm:$0xff pattern:$0x75316420]
    %99 = vrot.lane.b32.xlu0 %v87, 127
    %v100 = vpop.permute.xlu0 %99
    %101 = vrot.lane.b32.xlu0 %v88, 127
    %v102 = vpop.permute.xlu0 %101
    %103 = vrot.lane.b32.xlu0 %v89, 127
    %v104 = vpop.permute.xlu0 %103
    %105 = vrot.lane.b32.xlu0 %v90, 127
    %v106 = vpop.permute.xlu0 %105
    %107 = vrot.lane.b32.xlu0 %v95, 127
    %v108 = vpop.permute.xlu0 %107
    %109 = vrot.lane.b32.xlu0 %v96, 127
    %v110 = vpop.permute.xlu0 %109
    %111 = vrot.lane.b32.xlu0 %v97, 127
    %v112 = vpop.permute.xlu0 %111
    %113 = vrot.lane.b32.xlu0 %v98, 127
    %v114 = vpop.permute.xlu0 %113
    %vm115 = vcmask 1039360
    %v116 = vsel %vm115, %v100, %v102
    %v117 = vsel %vm115, %v102, %v104
    %v118 = vsel %vm115, %v104, %v106
    %v119 = vsel %vm115, %v108, %v110
    %v120 = vsel %vm115, %v110, %v112
    %v121 = vsel %vm115, %v112, %v114
    %128 = vst [vmem:[#allocation2] sm:$0xf0] %v116
    %129 = vst [vmem:[#allocation2 + $0x8] sm:$0xf0] %v117
    %130 = vst [vmem:[#allocation2 + $0x10] sm:$0xf0] %v118
    %131 = vst [vmem:[#allocation2 + $0x78] sm:$0xf0] %v119
    %132 = vst [vmem:[#allocation2 + $0x80] sm:$0xf0] %v120
    %133 = vst [vmem:[#allocation2 + $0x88] sm:$0xf0] %v121
    %v134 = vld [vmem:[#allocation3] sm:$0xff]
    %v135 = vld [vmem:[#allocation3 + $0x8] sm:$0xff]
    %v136 = vld [vmem:[#allocation3 + $0x10] sm:$0xff]
    %v137 = vld [vmem:[#allocation3 + $0x18] sm:$0xff]
    %142 = vst [vmem:[#allocation1] ss:$2 sm:$0xff] %v134
    %s143 = scalar_lea.vmem [#allocation1], 16
    %144 = vst [vmem:[%s143] ss:$2 sm:$0xff] %v135
    %v145 = vld.sshfl [vmem:[#allocation1] sm:$0xff pattern:$0x75316420]
    %v146 = vld.sshfl [vmem:[#allocation1 + $0x8] sm:$0xff pattern:$0x75316420]
    %v147 = vld.sshfl [vmem:[#allocation1 + $0x10] sm:$0xff pattern:$0x75316420]
    %v148 = vld.sshfl [vmem:[#allocation1 + $0x18] sm:$0xff pattern:$0x75316420]
    %s149 = scalar_lea.vmem [#allocation1], 32
    %150 = vst [vmem:[%s149] ss:$2 sm:$0xff] %v136
    %s151 = scalar_lea.vmem [#allocation1], 48
    %152 = vst [vmem:[%s151] ss:$2 sm:$0xff] %v137
    %v153 = vld.sshfl [vmem:[#allocation1 + $0x20] sm:$0xff pattern:$0x75316420]
    %v154 = vld.sshfl [vmem:[#allocation1 + $0x28] sm:$0xff pattern:$0x75316420]
    %v155 = vld.sshfl [vmem:[#allocation1 + $0x30] sm:$0xff pattern:$0x75316420]
    %v156 = vld.sshfl [vmem:[#allocation1 + $0x38] sm:$0xff pattern:$0x75316420]
    %157 = vrot.lane.b32.xlu0 %v145, 126
    %v158 = vpop.permute.xlu0 %157
    %159 = vrot.lane.b32.xlu0 %v146, 126
    %v160 = vpop.permute.xlu0 %159
    %161 = vrot.lane.b32.xlu0 %v147, 126
    %v162 = vpop.permute.xlu0 %161
    %163 = vrot.lane.b32.xlu0 %v148, 126
    %v164 = vpop.permute.xlu0 %163
    %165 = vrot.lane.b32.xlu0 %v153, 126
    %v166 = vpop.permute.xlu0 %165
    %167 = vrot.lane.b32.xlu0 %v154, 126
    %v168 = vpop.permute.xlu0 %167
    %169 = vrot.lane.b32.xlu0 %v155, 126
    %v170 = vpop.permute.xlu0 %169
    %171 = vrot.lane.b32.xlu0 %v156, 126
    %v172 = vpop.permute.xlu0 %171
    %vm173 = vcmask 1031168
    %v174 = vsel %vm173, %v158, %v160
    %v175 = vsel %vm173, %v160, %v162
    %v176 = vsel %vm173, %v162, %v164
    %v177 = vsel %vm173, %v166, %v168
    %v178 = vsel %vm173, %v168, %v170
    %v179 = vsel %vm173, %v170, %v172
    %186 = vst [vmem:[#allocation2 + $0x18] sm:$0xf] %v174
    %187 = vst [vmem:[#allocation2 + $0x20] sm:$0xf] %v175
    %188 = vst [vmem:[#allocation2 + $0x28] sm:$0xf] %v176
    %189 = vst [vmem:[#allocation2 + $0x90] sm:$0xf] %v177
    %190 = vst [vmem:[#allocation2 + $0x98] sm:$0xf] %v178
    %191 = vst [vmem:[#allocation2 + $0xa0] sm:$0xf] %v179
    %v192 = vld [vmem:[#allocation3] sm:$0xff]
    %v193 = vld [vmem:[#allocation3 + $0x8] sm:$0xff]
    %v194 = vld [vmem:[#allocation3 + $0x10] sm:$0xff]
    %v195 = vld [vmem:[#allocation3 + $0x18] sm:$0xff]
    %s200 = scalar_lea.vmem [#allocation1], 1
    %201 = vst [vmem:[%s200] ss:$2 sm:$0xff] %v192
    %s202 = scalar_lea.vmem [#allocation1], 17
    %203 = vst [vmem:[%s202] ss:$2 sm:$0xff] %v193
    %v204 = vld.sshfl [vmem:[#allocation1] sm:$0xff pattern:$0x75316420]
    %v205 = vld.sshfl [vmem:[#allocation1 + $0x8] sm:$0xff pattern:$0x75316420]
    %v206 = vld.sshfl [vmem:[#allocation1 + $0x10] sm:$0xff pattern:$0x75316420]
    %v207 = vld.sshfl [vmem:[#allocation1 + $0x18] sm:$0xff pattern:$0x75316420]
    %s208 = scalar_lea.vmem [#allocation1], 33
    %209 = vst [vmem:[%s208] ss:$2 sm:$0xff] %v194
    %s210 = scalar_lea.vmem [#allocation1], 49
    %211 = vst [vmem:[%s210] ss:$2 sm:$0xff] %v195
    %v212 = vld.sshfl [vmem:[#allocation1 + $0x20] sm:$0xff pattern:$0x75316420]
    %v213 = vld.sshfl [vmem:[#allocation1 + $0x28] sm:$0xff pattern:$0x75316420]
    %v214 = vld.sshfl [vmem:[#allocation1 + $0x30] sm:$0xff pattern:$0x75316420]
    %v215 = vld.sshfl [vmem:[#allocation1 + $0x38] sm:$0xff pattern:$0x75316420]
    %216 = vrot.lane.b32.xlu0 %v204, 108
    %v217 = vpop.permute.xlu0 %216
    %218 = vrot.lane.b32.xlu0 %v205, 108
    %v219 = vpop.permute.xlu0 %218
    %220 = vrot.lane.b32.xlu0 %v206, 108
    %v221 = vpop.permute.xlu0 %220
    %222 = vrot.lane.b32.xlu0 %v207, 108
    %v223 = vpop.permute.xlu0 %222
    %224 = vrot.lane.b32.xlu0 %v212, 108
    %v225 = vpop.permute.xlu0 %224
    %226 = vrot.lane.b32.xlu0 %v213, 108
    %v227 = vpop.permute.xlu0 %226
    %228 = vrot.lane.b32.xlu0 %v214, 108
    %v229 = vpop.permute.xlu0 %228
    %230 = vrot.lane.b32.xlu0 %v215, 108
    %v231 = vpop.permute.xlu0 %230
    %vm232 = vcmask 883712
    %v233 = vsel %vm232, %v217, %v219
    %v234 = vsel %vm232, %v219, %v221
    %v235 = vsel %vm232, %v221, %v223
    %v236 = vsel %vm232, %v225, %v227
    %v237 = vsel %vm232, %v227, %v229
    %v238 = vsel %vm232, %v229, %v231
    %245 = vst [vmem:[#allocation2 + $0x18] sm:$0xf0] %v233
    %246 = vst [vmem:[#allocation2 + $0x20] sm:$0xf0] %v234
    %247 = vst [vmem:[#allocation2 + $0x28] sm:$0xf0] %v235
    %248 = vst [vmem:[#allocation2 + $0x90] sm:$0xf0] %v236
    %249 = vst [vmem:[#allocation2 + $0x98] sm:$0xf0] %v237
    %250 = vst [vmem:[#allocation2 + $0xa0] sm:$0xf0] %v238
    %v251 = vld [vmem:[#allocation3] sm:$0xff]
    %v252 = vld [vmem:[#allocation3 + $0x8] sm:$0xff]
    %v253 = vld [vmem:[#allocation3 + $0x10] sm:$0xff]
    %v254 = vld [vmem:[#allocation3 + $0x18] sm:$0xff]
    %259 = vst [vmem:[#allocation1] ss:$2 sm:$0xff] %v251
    %s260 = scalar_lea.vmem [#allocation1], 16
    %261 = vst [vmem:[%s260] ss:$2 sm:$0xff] %v252
    %v262 = vld.sshfl [vmem:[#allocation1] sm:$0xff pattern:$0x75316420]
    %v263 = vld.sshfl [vmem:[#allocation1 + $0x8] sm:$0xff pattern:$0x75316420]
    %v264 = vld.sshfl [vmem:[#allocation1 + $0x10] sm:$0xff pattern:$0x75316420]
    %v265 = vld.sshfl [vmem:[#allocation1 + $0x18] sm:$0xff pattern:$0x75316420]
    %s266 = scalar_lea.vmem [#allocation1], 32
    %267 = vst [vmem:[%s266] ss:$2 sm:$0xff] %v253
    %s268 = scalar_lea.vmem [#allocation1], 48
    %269 = vst [vmem:[%s268] ss:$2 sm:$0xff] %v254
    %v270 = vld.sshfl [vmem:[#allocation1 + $0x20] sm:$0xff pattern:$0x75316420]
    %v271 = vld.sshfl [vmem:[#allocation1 + $0x28] sm:$0xff pattern:$0x75316420]
    %v272 = vld.sshfl [vmem:[#allocation1 + $0x30] sm:$0xff pattern:$0x75316420]
    %v273 = vld.sshfl [vmem:[#allocation1 + $0x38] sm:$0xff pattern:$0x75316420]
    %274 = vrot.lane.b32.xlu0 %v262, 107
    %v275 = vpop.permute.xlu0 %274
    %276 = vrot.lane.b32.xlu0 %v263, 107
    %v277 = vpop.permute.xlu0 %276
    %278 = vrot.lane.b32.xlu0 %v264, 107
    %v279 = vpop.permute.xlu0 %278
    %280 = vrot.lane.b32.xlu0 %v265, 107
    %v281 = vpop.permute.xlu0 %280
    %282 = vrot.lane.b32.xlu0 %v270, 107
    %v283 = vpop.permute.xlu0 %282
    %284 = vrot.lane.b32.xlu0 %v271, 107
    %v285 = vpop.permute.xlu0 %284
    %286 = vrot.lane.b32.xlu0 %v272, 107
    %v287 = vpop.permute.xlu0 %286
    %288 = vrot.lane.b32.xlu0 %v273, 107
    %v289 = vpop.permute.xlu0 %288
    %vm290 = vcmask 875520
    %v291 = vsel %vm290, %v275, %v277
    %v292 = vsel %vm290, %v277, %v279
    %v293 = vsel %vm290, %v279, %v281
    %v294 = vsel %vm290, %v283, %v285
    %v295 = vsel %vm290, %v285, %v287
    %v296 = vsel %vm290, %v287, %v289
    %303 = vst [vmem:[#allocation2 + $0x30] sm:$0xf] %v291
    %304 = vst [vmem:[#allocation2 + $0x38] sm:$0xf] %v292
    %305 = vst [vmem:[#allocation2 + $0x40] sm:$0xf] %v293
    %306 = vst [vmem:[#allocation2 + $0xa8] sm:$0xf] %v294
    %307 = vst [vmem:[#allocation2 + $0xb0] sm:$0xf] %v295
    %308 = vst [vmem:[#allocation2 + $0xb8] sm:$0xf] %v296
    %v309 = vld [vmem:[#allocation3] sm:$0xff]
    %v310 = vld [vmem:[#allocation3 + $0x8] sm:$0xff]
    %v311 = vld [vmem:[#allocation3 + $0x10] sm:$0xff]
    %v312 = vld [vmem:[#allocation3 + $0x18] sm:$0xff]
    %s317 = scalar_lea.vmem [#allocation1], 1
    %318 = vst [vmem:[%s317] ss:$2 sm:$0xff] %v309
    %s319 = scalar_lea.vmem [#allocation1], 17
    %320 = vst [vmem:[%s319] ss:$2 sm:$0xff] %v310
    %v321 = vld.sshfl [vmem:[#allocation1] sm:$0xff pattern:$0x75316420]
    %v322 = vld.sshfl [vmem:[#allocation1 + $0x8] sm:$0xff pattern:$0x75316420]
    %v323 = vld.sshfl [vmem:[#allocation1 + $0x10] sm:$0xff pattern:$0x75316420]
    %v324 = vld.sshfl [vmem:[#allocation1 + $0x18] sm:$0xff pattern:$0x75316420]
    %s325 = scalar_lea.vmem [#allocation1], 33
    %326 = vst [vmem:[%s325] ss:$2 sm:$0xff] %v311
    %s327 = scalar_lea.vmem [#allocation1], 49
    %328 = vst [vmem:[%s327] ss:$2 sm:$0xff] %v312
    %v329 = vld.sshfl [vmem:[#allocation1 + $0x20] sm:$0xff pattern:$0x75316420]
    %v330 = vld.sshfl [vmem:[#allocation1 + $0x28] sm:$0xff pattern:$0x75316420]
    %v331 = vld.sshfl [vmem:[#allocation1 + $0x30] sm:$0xff pattern:$0x75316420]
    %v332 = vld.sshfl [vmem:[#allocation1 + $0x38] sm:$0xff pattern:$0x75316420]
    %333 = vrot.lane.b32.xlu0 %v321, 106
    %v334 = vpop.permute.xlu0 %333
    %335 = vrot.lane.b32.xlu0 %v322, 106
    %v336 = vpop.permute.xlu0 %335
    %337 = vrot.lane.b32.xlu0 %v323, 106
    %v338 = vpop.permute.xlu0 %337
    %339 = vrot.lane.b32.xlu0 %v324, 106
    %v340 = vpop.permute.xlu0 %339
    %341 = vrot.lane.b32.xlu0 %v329, 106
    %v342 = vpop.permute.xlu0 %341
    %343 = vrot.lane.b32.xlu0 %v330, 106
    %v344 = vpop.permute.xlu0 %343
    %345 = vrot.lane.b32.xlu0 %v331, 106
    %v346 = vpop.permute.xlu0 %345
    %347 = vrot.lane.b32.xlu0 %v332, 106
    %v348 = vpop.permute.xlu0 %347
    %vm349 = vcmask 867328
    %v350 = vsel %vm349, %v334, %v336
    %v351 = vsel %vm349, %v336, %v338
    %v352 = vsel %vm349, %v338, %v340
    %v353 = vsel %vm349, %v342, %v344
    %v354 = vsel %vm349, %v344, %v346
    %v355 = vsel %vm349, %v346, %v348
    %362 = vst [vmem:[#allocation2 + $0x30] sm:$0xf0] %v350
    %363 = vst [vmem:[#allocation2 + $0x38] sm:$0xf0] %v351
    %364 = vst [vmem:[#allocation2 + $0x40] sm:$0xf0] %v352
    %365 = vst [vmem:[#allocation2 + $0xa8] sm:$0xf0] %v353
    %366 = vst [vmem:[#allocation2 + $0xb0] sm:$0xf0] %v354
    %367 = vst [vmem:[#allocation2 + $0xb8] sm:$0xf0] %v355
    %v368 = vld [vmem:[#allocation3] sm:$0xff]
    %v369 = vld [vmem:[#allocation3 + $0x8] sm:$0xff]
    %v370 = vld [vmem:[#allocation3 + $0x10] sm:$0xff]
    %v371 = vld [vmem:[#allocation3 + $0x18] sm:$0xff]
    %376 = vst [vmem:[#allocation1] ss:$2 sm:$0xff] %v368
    %s377 = scalar_lea.vmem [#allocation1], 16
    %378 = vst [vmem:[%s377] ss:$2 sm:$0xff] %v369
    %v379 = vld.sshfl [vmem:[#allocation1] sm:$0xff pattern:$0x75316420]
    %v380 = vld.sshfl [vmem:[#allocation1 + $0x8] sm:$0xff pattern:$0x75316420]
    %v381 = vld.sshfl [vmem:[#allocation1 + $0x10] sm:$0xff pattern:$0x75316420]
    %v382 = vld.sshfl [vmem:[#allocation1 + $0x18] sm:$0xff pattern:$0x75316420]
    %s383 = scalar_lea.vmem [#allocation1], 32
    %384 = vst [vmem:[%s383] ss:$2 sm:$0xff] %v370
    %s385 = scalar_lea.vmem [#allocation1], 48
    %386 = vst [vmem:[%s385] ss:$2 sm:$0xff] %v371
    %v387 = vld.sshfl [vmem:[#allocation1 + $0x20] sm:$0xff pattern:$0x75316420]
    %v388 = vld.sshfl [vmem:[#allocation1 + $0x28] sm:$0xff pattern:$0x75316420]
    %v389 = vld.sshfl [vmem:[#allocation1 + $0x30] sm:$0xff pattern:$0x75316420]
    %v390 = vld.sshfl [vmem:[#allocation1 + $0x38] sm:$0xff pattern:$0x75316420]
    %391 = vrot.lane.b32.xlu0 %v379, 88
    %v392 = vpop.permute.xlu0 %391
    %393 = vrot.lane.b32.xlu0 %v380, 88
    %v394 = vpop.permute.xlu0 %393
    %395 = vrot.lane.b32.xlu0 %v381, 88
    %v396 = vpop.permute.xlu0 %395
    %397 = vrot.lane.b32.xlu0 %v382, 88
    %v398 = vpop.permute.xlu0 %397
    %399 = vrot.lane.b32.xlu0 %v387, 88
    %v400 = vpop.permute.xlu0 %399
    %401 = vrot.lane.b32.xlu0 %v388, 88
    %v402 = vpop.permute.xlu0 %401
    %403 = vrot.lane.b32.xlu0 %v389, 88
    %v404 = vpop.permute.xlu0 %403
    %405 = vrot.lane.b32.xlu0 %v390, 88
    %v406 = vpop.permute.xlu0 %405
    %vm407 = vcmask 719872
    %v408 = vsel %vm407, %v392, %v394
    %v409 = vsel %vm407, %v394, %v396
    %v410 = vsel %vm407, %v396, %v398
    %v411 = vsel %vm407, %v400, %v402
    %v412 = vsel %vm407, %v402, %v404
    %v413 = vsel %vm407, %v404, %v406
    %420 = vst [vmem:[#allocation2 + $0x48] sm:$0xf] %v408
    %421 = vst [vmem:[#allocation2 + $0x50] sm:$0xf] %v409
    %422 = vst [vmem:[#allocation2 + $0x58] sm:$0xf] %v410
    %423 = vst [vmem:[#allocation2 + $0xc0] sm:$0xf] %v411
    %424 = vst [vmem:[#allocation2 + $0xc8] sm:$0xf] %v412
    %425 = vst [vmem:[#allocation2 + $0xd0] sm:$0xf] %v413
    %v426 = vld [vmem:[#allocation3] sm:$0xff]
    %v427 = vld [vmem:[#allocation3 + $0x8] sm:$0xff]
    %v428 = vld [vmem:[#allocation3 + $0x10] sm:$0xff]
    %v429 = vld [vmem:[#allocation3 + $0x18] sm:$0xff]
    %s434 = scalar_lea.vmem [#allocation1], 1
    %435 = vst [vmem:[%s434] ss:$2 sm:$0xff] %v426
    %s436 = scalar_lea.vmem [#allocation1], 17
    %437 = vst [vmem:[%s436] ss:$2 sm:$0xff] %v427
    %v438 = vld.sshfl [vmem:[#allocation1] sm:$0xff pattern:$0x75316420]
    %v439 = vld.sshfl [vmem:[#allocation1 + $0x8] sm:$0xff pattern:$0x75316420]
    %v440 = vld.sshfl [vmem:[#allocation1 + $0x10] sm:$0xff pattern:$0x75316420]
    %v441 = vld.sshfl [vmem:[#allocation1 + $0x18] sm:$0xff pattern:$0x75316420]
    %s442 = scalar_lea.vmem [#allocation1], 33
    %443 = vst [vmem:[%s442] ss:$2 sm:$0xff] %v428
    %s444 = scalar_lea.vmem [#allocation1], 49
    %445 = vst [vmem:[%s444] ss:$2 sm:$0xff] %v429
    %v446 = vld.sshfl [vmem:[#allocation1 + $0x20] sm:$0xff pattern:$0x75316420]
    %v447 = vld.sshfl [vmem:[#allocation1 + $0x28] sm:$0xff pattern:$0x75316420]
    %v448 = vld.sshfl [vmem:[#allocation1 + $0x30] sm:$0xff pattern:$0x75316420]
    %v449 = vld.sshfl [vmem:[#allocation1 + $0x38] sm:$0xff pattern:$0x75316420]
    %450 = vrot.lane.b32.xlu0 %v438, 87
    %v451 = vpop.permute.xlu0 %450
    %452 = vrot.lane.b32.xlu0 %v439, 87
    %v453 = vpop.permute.xlu0 %452
    %454 = vrot.lane.b32.xlu0 %v440, 87
    %v455 = vpop.permute.xlu0 %454
    %456 = vrot.lane.b32.xlu0 %v441, 87
    %v457 = vpop.permute.xlu0 %456
    %458 = vrot.lane.b32.xlu0 %v446, 87
    %v459 = vpop.permute.xlu0 %458
    %460 = vrot.lane.b32.xlu0 %v447, 87
    %v461 = vpop.permute.xlu0 %460
    %462 = vrot.lane.b32.xlu0 %v448, 87
    %v463 = vpop.permute.xlu0 %462
    %464 = vrot.lane.b32.xlu0 %v449, 87
    %v465 = vpop.permute.xlu0 %464
    %vm466 = vcmask 711680
    %v467 = vsel %vm466, %v451, %v453
    %v468 = vsel %vm466, %v453, %v455
    %v469 = vsel %vm466, %v455, %v457
    %v470 = vsel %vm466, %v459, %v461
    %v471 = vsel %vm466, %v461, %v463
    %v472 = vsel %vm466, %v463, %v465
    %479 = vst [vmem:[#allocation2 + $0x48] sm:$0xf0] %v467
    %480 = vst [vmem:[#allocation2 + $0x50] sm:$0xf0] %v468
    %481 = vst [vmem:[#allocation2 + $0x58] sm:$0xf0] %v469
    %482 = vst [vmem:[#allocation2 + $0xc0] sm:$0xf0] %v470
    %483 = vst [vmem:[#allocation2 + $0xc8] sm:$0xf0] %v471
    %484 = vst [vmem:[#allocation2 + $0xd0] sm:$0xf0] %v472
    %v485 = vld [vmem:[#allocation3] sm:$0xff]
    %v486 = vld [vmem:[#allocation3 + $0x8] sm:$0xff]
    %v487 = vld [vmem:[#allocation3 + $0x10] sm:$0xff]
    %v488 = vld [vmem:[#allocation3 + $0x18] sm:$0xff]
    %493 = vst [vmem:[#allocation1] ss:$2 sm:$0xff] %v485
    %s494 = scalar_lea.vmem [#allocation1], 16
    %495 = vst [vmem:[%s494] ss:$2 sm:$0xff] %v486
    %v496 = vld.sshfl [vmem:[#allocation1] sm:$0xff pattern:$0x75316420]
    %v497 = vld.sshfl [vmem:[#allocation1 + $0x8] sm:$0xff pattern:$0x75316420]
    %v498 = vld.sshfl [vmem:[#allocation1 + $0x10] sm:$0xff pattern:$0x75316420]
    %v499 = vld.sshfl [vmem:[#allocation1 + $0x18] sm:$0xff pattern:$0x75316420]
    %s500 = scalar_lea.vmem [#allocation1], 32
    %501 = vst [vmem:[%s500] ss:$2 sm:$0xff] %v487
    %s502 = scalar_lea.vmem [#allocation1], 48
    %503 = vst [vmem:[%s502] ss:$2 sm:$0xff] %v488
    %v504 = vld.sshfl [vmem:[#allocation1 + $0x20] sm:$0xff pattern:$0x75316420]
    %v505 = vld.sshfl [vmem:[#allocation1 + $0x28] sm:$0xff pattern:$0x75316420]
    %v506 = vld.sshfl [vmem:[#allocation1 + $0x30] sm:$0xff pattern:$0x75316420]
    %v507 = vld.sshfl [vmem:[#allocation1 + $0x38] sm:$0xff pattern:$0x75316420]
    %508 = vrot.lane.b32.xlu0 %v496, 86
    %v509 = vpop.permute.xlu0 %508
    %510 = vrot.lane.b32.xlu0 %v497, 86
    %v511 = vpop.permute.xlu0 %510
    %512 = vrot.lane.b32.xlu0 %v498, 86
    %v513 = vpop.permute.xlu0 %512
    %514 = vrot.lane.b32.xlu0 %v499, 86
    %v515 = vpop.permute.xlu0 %514
    %516 = vrot.lane.b32.xlu0 %v504, 86
    %v517 = vpop.permute.xlu0 %516
    %518 = vrot.lane.b32.xlu0 %v505, 86
    %v519 = vpop.permute.xlu0 %518
    %520 = vrot.lane.b32.xlu0 %v506, 86
    %v521 = vpop.permute.xlu0 %520
    %522 = vrot.lane.b32.xlu0 %v507, 86
    %v523 = vpop.permute.xlu0 %522
    %vm524 = vcmask 703488
    %v525 = vsel %vm524, %v509, %v511
    %v526 = vsel %vm524, %v511, %v513
    %v527 = vsel %vm524, %v513, %v515
    %v528 = vsel %vm524, %v517, %v519
    %v529 = vsel %vm524, %v519, %v521
    %v530 = vsel %vm524, %v521, %v523
    %537 = vst [vmem:[#allocation2 + $0x60] sm:$0xf] %v525
    %538 = vst [vmem:[#allocation2 + $0x68] sm:$0xf] %v526
    %539 = vst [vmem:[#allocation2 + $0x70] sm:$0xf] %v527
    %540 = vst [vmem:[#allocation2 + $0xd8] sm:$0xf] %v528
    %541 = vst [vmem:[#allocation2 + $0xe0] sm:$0xf] %v529
    %542 = vst [vmem:[#allocation2 + $0xe8] sm:$0xf] %v530
    %v543 = vlaneseq
    %vm544 = vcmp.ge.s32.totalorder %v543, 0
    %vm545 = vcmp.lt.s32.totalorder %v543, 384
    %vm546 = vmand %vm544, %vm545
    %s547 = scalar_lea.vmem [#allocation2], 100
    %548 = vst.msk [vmem:[%s547] ss:$8 sm:$0x7] %vm546, 1.0
    %549 = vst.msk [vmem:[%s547] ss:$8 sm:$0x0] %vm546, 1.0
    %s550 = scalar_lea.vmem [#allocation2], 220
    %551 = vst.msk [vmem:[%s550] ss:$8 sm:$0x7] %vm546, 1.0
    %552 = vst.msk [vmem:[%s550] ss:$8 sm:$0x0] %vm546, 1.0
    %v553 = vld [vmem:[#allocation6] sm:$0xff]
    %v554 = vld [vmem:[#allocation2] sm:$0xff]
    %v555 = vld [vmem:[#allocation2 + $0x8] sm:$0xff]
    %v556 = vld [vmem:[#allocation2 + $0x10] sm:$0xff]
    %v557 = vld [vmem:[#allocation2 + $0x18] sm:$0xff]
    %v558 = vld [vmem:[#allocation2 + $0x20] sm:$0xff]
    %v559 = vld [vmem:[#allocation2 + $0x28] sm:$0xff]
    %v560 = vld [vmem:[#allocation2 + $0x30] sm:$0xff]
    %v561 = vld [vmem:[#allocation2 + $0x38] sm:$0xff]
    %v562 = vld [vmem:[#allocation2 + $0x40] sm:$0xff]
    %v563 = vld [vmem:[#allocation2 + $0x48] sm:$0xff]
    %v564 = vld [vmem:[#allocation2 + $0x50] sm:$0xff]
    %v565 = vld [vmem:[#allocation2 + $0x58] sm:$0xff]
    %v566 = vld [vmem:[#allocation2 + $0x60] sm:$0x1f]
    %v567 = vld [vmem:[#allocation2 + $0x68] sm:$0x1f]
    %v568 = vld [vmem:[#allocation2 + $0x70] sm:$0x1f]
    %vm569 = vcmask 302080
    %v571 = vsel %vm569, %v553, 0
    %vm573 = vcmask 1044480
    %v575 = vsel %vm573, %v566, 0
    %v578 = vsel %vm573, %v567, 0
    %v581 = vsel %vm573, %v568, 0
    %583 = vmatpush.msra.mxu0 0.0
    %584 = vmatpush.msra.mxu0 0.0
    %585 = vmatpush.msra.mxu0 0.0
    %586 = vmatpush.msra.mxu0 0.0
    %587 = vmatpush.msra.mxu0 0.0
    %588 = vmatpush.msra.mxu0 0.0
    %589 = vmatpush.msra.mxu0 0.0
    %590 = vmatpush.msra.mxu0 0.0
    %591 = vmatpush.msra.mxu0 0.0
    %592 = vmatpush.msra.mxu0 0.0
    %593 = vmatpush.msra.mxu0 0.0
    %594 = vmatpush.msra.mxu0 %v575
    %595 = vmatpush.msra.mxu0 %v563
    %596 = vmatpush.msra.mxu0 %v560
    %597 = vmatpush.msra.mxu0 %v557
    %598 = vmatpush.msra.mxu0 %v554
    %599 = vmatmul.f32.gmra.mxu0 %v571
    %v600 = vpop.f32.mrf.mxu0
    %v601 = vadd.f32 0.0, %v600
    %602 = vdwg.mxu0
    %603 = vmatpush.msra.mxu0 0.0
    %604 = vmatpush.msra.mxu0 0.0
    %605 = vmatpush.msra.mxu0 0.0
    %606 = vmatpush.msra.mxu0 0.0
    %607 = vmatpush.msra.mxu0 0.0
    %608 = vmatpush.msra.mxu0 0.0
    %609 = vmatpush.msra.mxu0 0.0
    %610 = vmatpush.msra.mxu0 0.0
    %611 = vmatpush.msra.mxu0 0.0
    %612 = vmatpush.msra.mxu0 0.0
    %613 = vmatpush.msra.mxu0 0.0
    %614 = vmatpush.msra.mxu0 %v578
    %615 = vmatpush.msra.mxu0 %v564
    %616 = vmatpush.msra.mxu0 %v561
    %617 = vmatpush.msra.mxu0 %v558
    %618 = vmatpush.msra.mxu0 %v555
    %619 = vmatmul.f32.gmra.mxu0 %v571
    %v620 = vpop.f32.mrf.mxu0
    %v621 = vadd.f32 0.0, %v620
    %622 = vdwg.mxu0
    %623 = vmatpush.msra.mxu0 0.0
    %624 = vmatpush.msra.mxu0 0.0
    %625 = vmatpush.msra.mxu0 0.0
    %626 = vmatpush.msra.mxu0 0.0
    %627 = vmatpush.msra.mxu0 0.0
    %628 = vmatpush.msra.mxu0 0.0
    %629 = vmatpush.msra.mxu0 0.0
    %630 = vmatpush.msra.mxu0 0.0
    %631 = vmatpush.msra.mxu0 0.0
    %632 = vmatpush.msra.mxu0 0.0
    %633 = vmatpush.msra.mxu0 0.0
    %634 = vmatpush.msra.mxu0 %v581
    %635 = vmatpush.msra.mxu0 %v565
    %636 = vmatpush.msra.mxu0 %v562
    %637 = vmatpush.msra.mxu0 %v559
    %638 = vmatpush.msra.mxu0 %v556
    %639 = vmatmul.f32.gmra.mxu0 %v571
    %v640 = vpop.f32.mrf.mxu0
    %v641 = vadd.f32 0.0, %v640
    %642 = vdwg.mxu0
    %v643 = vmax.f32 %v601, 0.0
    %v644 = vmax.f32 %v621, 0.0
    %v645 = vmax.f32 %v641, 0.0
    %646 = vst [vmem:[#allocation8] sm:$0xff] %v643
    %647 = vst [vmem:[#allocation8 + $0x8] sm:$0xff] %v644
    %648 = vst [vmem:[#allocation8 + $0x10] sm:$0xff] %v645
    %s649 = scalar_lea.vmem [#allocation2], 120
    %v650 = vld [vmem:[%s649] sm:$0xff]
    %v651 = vld [vmem:[%s649 + $0x8] sm:$0xff]
    %v652 = vld [vmem:[%s649 + $0x10] sm:$0xff]
    %v653 = vld [vmem:[%s649 + $0x18] sm:$0xff]
    %v654 = vld [vmem:[%s649 + $0x20] sm:$0xff]
    %v655 = vld [vmem:[%s649 + $0x28] sm:$0xff]
    %v656 = vld [vmem:[%s649 + $0x30] sm:$0xff]
    %v657 = vld [vmem:[%s649 + $0x38] sm:$0xff]
    %v658 = vld [vmem:[%s649 + $0x40] sm:$0xff]
    %v659 = vld [vmem:[%s649 + $0x48] sm:$0xff]
    %v660 = vld [vmem:[%s649 + $0x50] sm:$0xff]
    %v661 = vld [vmem:[%s649 + $0x58] sm:$0xff]
    %v662 = vld [vmem:[%s649 + $0x60] sm:$0x1f]
    %v663 = vld [vmem:[%s649 + $0x68] sm:$0x1f]
    %v664 = vld [vmem:[%s649 + $0x70] sm:$0x1f]
    %v666 = vsel %vm573, %v662, 0
    %v669 = vsel %vm573, %v663, 0
    %v672 = vsel %vm573, %v664, 0
    %674 = vmatpush.msra.mxu0 0.0
    %675 = vmatpush.msra.mxu0 0.0
    %676 = vmatpush.msra.mxu0 0.0
    %677 = vmatpush.msra.mxu0 0.0
    %678 = vmatpush.msra.mxu0 0.0
    %679 = vmatpush.msra.mxu0 0.0
    %680 = vmatpush.msra.mxu0 0.0
    %681 = vmatpush.msra.mxu0 0.0
    %682 = vmatpush.msra.mxu0 0.0
    %683 = vmatpush.msra.mxu0 0.0
    %684 = vmatpush.msra.mxu0 0.0
    %685 = vmatpush.msra.mxu0 %v666
    %686 = vmatpush.msra.mxu0 %v659
    %687 = vmatpush.msra.mxu0 %v656
    %688 = vmatpush.msra.mxu0 %v653
    %689 = vmatpush.msra.mxu0 %v650
    %690 = vmatmul.f32.gmra.mxu0 %v571
    %v691 = vpop.f32.mrf.mxu0
    %v692 = vadd.f32 0.0, %v691
    %693 = vdwg.mxu0
    %694 = vmatpush.msra.mxu0 0.0
    %695 = vmatpush.msra.mxu0 0.0
    %696 = vmatpush.msra.mxu0 0.0
    %697 = vmatpush.msra.mxu0 0.0
    %698 = vmatpush.msra.mxu0 0.0
    %699 = vmatpush.msra.mxu0 0.0
    %700 = vmatpush.msra.mxu0 0.0
    %701 = vmatpush.msra.mxu0 0.0
    %702 = vmatpush.msra.mxu0 0.0
    %703 = vmatpush.msra.mxu0 0.0
    %704 = vmatpush.msra.mxu0 0.0
    %705 = vmatpush.msra.mxu0 %v669
    %706 = vmatpush.msra.mxu0 %v660
    %707 = vmatpush.msra.mxu0 %v657
    %708 = vmatpush.msra.mxu0 %v654
    %709 = vmatpush.msra.mxu0 %v651
    %710 = vmatmul.f32.gmra.mxu0 %v571
    %v711 = vpop.f32.mrf.mxu0
    %v712 = vadd.f32 0.0, %v711
    %713 = vdwg.mxu0
    %714 = vmatpush.msra.mxu0 0.0
    %715 = vmatpush.msra.mxu0 0.0
    %716 = vmatpush.msra.mxu0 0.0
    %717 = vmatpush.msra.mxu0 0.0
    %718 = vmatpush.msra.mxu0 0.0
    %719 = vmatpush.msra.mxu0 0.0
    %720 = vmatpush.msra.mxu0 0.0
    %721 = vmatpush.msra.mxu0 0.0
    %722 = vmatpush.msra.mxu0 0.0
    %723 = vmatpush.msra.mxu0 0.0
    %724 = vmatpush.msra.mxu0 0.0
    %725 = vmatpush.msra.mxu0 %v672
    %726 = vmatpush.msra.mxu0 %v661
    %727 = vmatpush.msra.mxu0 %v658
    %728 = vmatpush.msra.mxu0 %v655
    %729 = vmatpush.msra.mxu0 %v652
    %730 = vmatmul.f32.gmra.mxu0 %v571
    %v731 = vpop.f32.mrf.mxu0
    %v732 = vadd.f32 0.0, %v731
    %733 = vdwg.mxu0
    %v734 = vmax.f32 %v692, 0.0
    %v735 = vmax.f32 %v712, 0.0
    %v736 = vmax.f32 %v732, 0.0
    %s737 = scalar_lea.vmem [#allocation8], 24
    %738 = vst [vmem:[%s737] sm:$0xff] %v734
    %739 = vst [vmem:[%s737 + $0x8] sm:$0xff] %v735
    %740 = vst [vmem:[%s737 + $0x10] sm:$0xff] %v736
    // Predicated region
    $region18: #{tpu_custom_call.1} parent=1 // pred_check
      _
    $region19: #{tpu_custom_call.1} parent=1 // pred_check_branch
      %742 = sbr.rel (0) target = $region21
    $region20: #{tpu_custom_call.1} parent=1 // pred_region
      %744 = vsyncadd [#allocation5], 0
      %s745 = sshll.u32 [#allocation8], 4
      %s746 = int_to_ptr.vmem [resolvable:$true] %s745
      %s747 = sshll.u32 %s2, 4
      %s748 = int_to_ptr.hbm [resolvable:$true] %s747
      %753 = dma.vmem_to_hbm [thread:$0]  %s746, 768, %s748, [#allocation5], 384, 384, 24
    $region21: #{tpu_custom_call.1} parent=1 // pred_fallthru
      _
    // Predicated region
    $region22: #{tpu_custom_call.1} parent=1 // pred_check
      _
    $region23: #{tpu_custom_call.1} parent=1 // pred_check_branch
      %755 = sbr.rel (0) target = $region25
    $region24: #{tpu_custom_call.1} parent=1 // pred_region
      %757 = dma.done [#allocation5], 768
    $region25: #{tpu_custom_call.1} parent=1 // pred_fallthru
      _
    %758 = vsyncpa [#allocation4], 1
    %759 = vsyncpa [#allocation7], 1
    %760 = vsyncpa [#allocation5], 1

</llo_original>
